<compile_context>
chip_gen: v7x
topology: tpu7x:2x2x1
jax: 0.10.0
libtpu: 0.0.40
codegen_flags: <defaults>
</compile_context>

<pallas_src>
import functools

import jax
import jax.numpy as jnp
from jax.experimental import pallas as pl
from jax.experimental.pallas import tpu as pltpu


def _round_up(n: int, m: int) -> int:
    return ((n + m - 1) // m) * m


def conmlp_kernel(x_ref, w1_ref, b1_ref, w2_ref, b2_ref, w3_ref, out_ref):
    # x arrives in its source dtype (f32); cast to bf16 at the MXU feed so the
    # wrapper never materializes a second copy of the input in HBM.
    x = x_ref[...].astype(jnp.bfloat16)
    # fc1 + ReLU  (bf16 inputs, f32 accumulate)
    h1 = jnp.dot(x, w1_ref[...], preferred_element_type=jnp.float32)
    h1 = jnp.maximum(h1 + b1_ref[...], 0.0)
    # fc2 + ReLU
    h2 = jnp.dot(h1.astype(jnp.bfloat16), w2_ref[...],
                 preferred_element_type=jnp.float32)
    h2 = jnp.maximum(h2 + b2_ref[...], 0.0)
    # linearhead (no bias); store bf16 to halve the padded output writeback
    out = jnp.dot(h2.astype(jnp.bfloat16), w3_ref[...],
                  preferred_element_type=jnp.float32)
    out_ref[...] = out.astype(out_ref.dtype)


def _prepare_params(params):
    """Zero-pad feature dims to multiples of 128; cast weights to bf16."""
    w1, b1, w2, b2, w3 = params
    in_dim, hid = w1.shape
    emb = w2.shape[1]
    ncls = w3.shape[1]
    in_p, hid_p = _round_up(in_dim, 128), _round_up(hid, 128)
    emb_p, ncls_p = _round_up(emb, 128), _round_up(ncls, 128)

    w1p = jnp.zeros((in_p, hid_p), jnp.bfloat16).at[:in_dim, :hid].set(
        w1.astype(jnp.bfloat16))
    b1p = jnp.zeros((1, hid_p), jnp.float32).at[:, :hid].set(
        b1.astype(jnp.float32))
    w2p = jnp.zeros((hid_p, emb_p), jnp.bfloat16).at[:hid, :emb].set(
        w2.astype(jnp.bfloat16))
    b2p = jnp.zeros((1, emb_p), jnp.float32).at[:, :emb].set(
        b2.astype(jnp.float32))
    w3p = jnp.zeros((emb_p, ncls_p), jnp.bfloat16).at[:emb, :ncls].set(
        w3.astype(jnp.bfloat16))
    return (w1p, b1p, w2p, b2p, w3p), (in_dim, ncls)


def _choose_tile_b(batch: int, in_p: int, hid_p: int, emb_p: int,
                   ncls_p: int, x_itemsize: int) -> int:
    """Pick a batch tile.

    Budget the tile-dependent VMEM (double-buffered f32 x, double-buffered bf16
    out, f32 h1/h2 intermediates) at ~24 MiB so that, together with the
    resident weights, we stay comfortably inside v7x's 64 MiB physical VMEM
    (and trivially inside v5e/v6e's 128 MiB).  Cap at 2048 rows; large batches
    are split into >= 4 grid steps so the 'parallel' axis feeds both v7x TCs.
    """
    budget = 24 << 20
    per_row = (2 * in_p * x_itemsize      # x, double-buffered
               + 2 * ncls_p * 2           # bf16 out, double-buffered
               + (hid_p + emb_p) * 4)     # f32 h1 / h2 intermediates
    tile = min(2048, budget // max(per_row, 1))
    tile = max(16, (tile // 16) * 16)
    if batch <= tile:
        return int(batch)                 # single step, zero batch padding
    # aim for at least 4 grid steps (megacore + full pipeline on v7x)
    tile = min(tile, _round_up(-(-batch // 4), 16))
    return int(max(tile, 16))


@jax.jit
def conmlp_forward(x, params):
    """x: (B, ...) — flattened to (B, in_dim) exactly like torch reshape (NCHW)."""
    (w1p, b1p, w2p, b2p, w3p), (in_dim, num_class) = _prepare_params(params)
    in_p, hid_p = w1p.shape
    emb_p, ncls_p = w3p.shape

    B = x.shape[0]
    x2d = x.reshape(B, -1)                       # free reshape, keep source dtype
    assert x2d.shape[1] == in_dim, (x2d.shape, in_dim)
    x_itemsize = jnp.dtype(x2d.dtype).itemsize

    # Conditional pads only (zero rows/cols are harmless and sliced off).
    if in_p != in_dim:
        x2d = jnp.pad(x2d, ((0, 0), (0, in_p - in_dim)))
    tile_b = _choose_tile_b(B, in_p, hid_p, emb_p, ncls_p, x_itemsize)
    b_pad = _round_up(B, tile_b)
    if b_pad != B:
        x2d = jnp.pad(x2d, ((0, b_pad - B), (0, 0)))

    grid = (b_pad // tile_b,)

    flops = 2 * b_pad * (in_p * hid_p + hid_p * emb_p + emb_p * ncls_p)
    bytes_accessed = (
        x2d.size * x_itemsize                          # input (source dtype)
        + (w1p.size + w2p.size + w3p.size) * 2         # bf16 weights
        + (b1p.size + b2p.size) * 4                    # f32 biases
        + b_pad * ncls_p * 2                           # bf16 output
    )

    # Explicit VMEM limit so tiles > the 16/32 MiB scoped defaults compile on
    # v5e/v6e/v7x; capped well under v7x's 64 MiB physical VMEM.
    tile_vmem = (2 * tile_b * in_p * x_itemsize
                 + 2 * tile_b * ncls_p * 2
                 + tile_b * (hid_p + emb_p) * 4
                 + 2 * (w1p.size + w2p.size + w3p.size) * 2
                 + 2 * (b1p.size + b2p.size) * 4)
    vmem_limit = int(min(56 << 20, max(32 << 20, tile_vmem + (8 << 20))))

    out = pl.pallas_call(
        conmlp_kernel,
        out_shape=jax.ShapeDtypeStruct((b_pad, ncls_p), jnp.bfloat16),
        grid=grid,
        in_specs=[
            pl.BlockSpec((tile_b, in_p), lambda i: (i, 0)),   # x: tiled over batch
            pl.BlockSpec((in_p, hid_p), lambda i: (0, 0)),    # weights/biases stay
            pl.BlockSpec((1, hid_p), lambda i: (0, 0)),       # VMEM-resident
            pl.BlockSpec((hid_p, emb_p), lambda i: (0, 0)),
            pl.BlockSpec((1, emb_p), lambda i: (0, 0)),
            pl.BlockSpec((emb_p, ncls_p), lambda i: (0, 0)),
        ],
        out_specs=pl.BlockSpec((tile_b, ncls_p), lambda i: (i, 0)),
        compiler_params=pltpu.CompilerParams(
            dimension_semantics=("parallel",),
            vmem_limit_bytes=vmem_limit),
        cost_estimate=pl.CostEstimate(
            flops=flops, transcendentals=0, bytes_accessed=bytes_accessed),
    )(x2d, w1p, b1p, w2p, b2p, w3p)

    return out[:B, :num_class].astype(jnp.float32)


def init_params(key, in_dim, hid_dim=120, emb_dim=60, num_class=10):
    """PyTorch-style init. Weights kept transposed (in, out) so kernel does x @ W."""
    k1, k2, k3, k4, k5 = jax.random.split(key, 5)

    def uni(k, shape, fan_in):
        bound = 1.0 / jnp.sqrt(fan_in)
        return jax.random.uniform(k, shape, jnp.float32, -bound, bound)

    w1 = uni(k1, (in_dim, hid_dim), in_dim)          # fc1.weight^T
    b1 = uni(k2, (1, hid_dim), in_dim)               # fc1.bias
    w2 = uni(k3, (hid_dim, emb_dim), hid_dim)        # fc2.weight^T
    b2 = uni(k4, (1, emb_dim), hid_dim)              # fc2.bias
    w3 = uni(k5, (emb_dim, num_class), emb_dim)      # linearhead.weight^T (no bias)
    return (w1, b1, w2, b2, w3)


def conmlp_reference_bf16(x, params):
    """Pure-JAX reference matching the kernel's bf16-in / f32-accumulate /
    bf16-store precision path."""
    w1, b1, w2, b2, w3 = params
    x2d = x.reshape(x.shape[0], -1).astype(jnp.bfloat16)
    h1 = jnp.maximum(
        jnp.dot(x2d, w1.astype(jnp.bfloat16),
                preferred_element_type=jnp.float32) + b1, 0.0)
    h2 = jnp.maximum(
        jnp.dot(h1.astype(jnp.bfloat16), w2.astype(jnp.bfloat16),
                preferred_element_type=jnp.float32) + b2, 0.0)
    out = jnp.dot(h2.astype(jnp.bfloat16), w3.astype(jnp.bfloat16),
                  preferred_element_type=jnp.float32)
    return out.astype(jnp.bfloat16).astype(jnp.float32)


if __name__ == "__main__":
    key = jax.random.PRNGKey(0)
    kx, kp = jax.random.split(key)

    # Small NCHW input: batch=2, channels=4, spatial=16x16 -> in_dim = 1024
    B, C, H, W = 2, 4, 16, 16
    in_dim = C * H * W
    x = jax.random.normal(kx, (B, C, H, W), dtype=jnp.float32)

    params = init_params(kp, in_dim, hid_dim=120, emb_dim=60, num_class=10)

    out = conmlp_forward(x, params)
    out = jax.block_until_ready(out)

    ref = conmlp_reference_bf16(x, params)
    assert out.shape == (B, 10), out.shape
    max_err = float(jnp.max(jnp.abs(out - ref)))
    assert jnp.allclose(out, ref, atol=2e-2, rtol=2e-2), max_err

    print("KERNEL_OK")
</pallas_src>

<mosaic_0001>
module attributes {stable_mosaic.version = 11 : i64} {
  func.func @conmlp_kernel(%arg0: i32, %arg1: memref<2x1024xf32, #tpu.memory_space<vmem>>, %arg2: memref<1024x128xbf16, #tpu.memory_space<vmem>>, %arg3: memref<1x128xf32, #tpu.memory_space<vmem>>, %arg4: memref<128x128xbf16, #tpu.memory_space<vmem>>, %arg5: memref<1x128xf32, #tpu.memory_space<vmem>>, %arg6: memref<128x128xbf16, #tpu.memory_space<vmem>>, %arg7: memref<2x128xbf16, #tpu.memory_space<vmem>>) attributes {dimension_semantics = [#tpu.dimension_semantics<parallel>], iteration_bounds = array<i64: 1>, scalar_prefetch = 0 : i64, scratch_operands = 0 : i64, tpu.core_type = #tpu.core_type<tc>, window_params = [{transform_indices = @transform_0, window_bounds = array<i64: 2, 1024>}, {pipeline_mode = #tpu.pipeline_mode<synchronous>, transform_indices = @transform_1, window_bounds = array<i64: 1024, 128>}, {pipeline_mode = #tpu.pipeline_mode<synchronous>, transform_indices = @transform_2, window_bounds = array<i64: 1, 128>}, {pipeline_mode = #tpu.pipeline_mode<synchronous>, transform_indices = @transform_3, window_bounds = array<i64: 128, 128>}, {pipeline_mode = #tpu.pipeline_mode<synchronous>, transform_indices = @transform_4, window_bounds = array<i64: 1, 128>}, {pipeline_mode = #tpu.pipeline_mode<synchronous>, transform_indices = @transform_5, window_bounds = array<i64: 128, 128>}, {transform_indices = @transform_6, window_bounds = array<i64: 2, 128>}]} {
    %c0 = arith.constant 0 : index
    %c0_0 = arith.constant 0 : index
    %0 = vector.load %arg1[%c0, %c0_0] : memref<2x1024xf32, #tpu.memory_space<vmem>>, vector<2x1024xf32>
    %1 = arith.truncf %0 : vector<2x1024xf32> to vector<2x1024xbf16>
    %c0_1 = arith.constant 0 : index
    %c0_2 = arith.constant 0 : index
    %2 = vector.load %arg2[%c0_1, %c0_2] : memref<1024x128xbf16, #tpu.memory_space<vmem>>, vector<1024x128xbf16>
    %cst = arith.constant dense<0.000000e+00> : vector<2x128xf32>
    %3 = tpu.matmul %1, %2, %cst {dimension_numbers = #tpu.dot_dimension_numbers<[1], [0], [0], [1], [0, 0, 1, 1], [], []>} : vector<2x1024xbf16>, vector<1024x128xbf16>, vector<2x128xf32> -> vector<2x128xf32>
    %c0_3 = arith.constant 0 : index
    %c0_4 = arith.constant 0 : index
    %4 = vector.load %arg3[%c0_3, %c0_4] : memref<1x128xf32, #tpu.memory_space<vmem>>, vector<1x128xf32>
    %5 = vector.broadcast %4 : vector<1x128xf32> to vector<2x128xf32>
    %6 = arith.addf %3, %5 : vector<2x128xf32>
    %cst_5 = arith.constant 0.000000e+00 : f32
    %7 = vector.broadcast %cst_5 : f32 to vector<2x128xf32>
    %8 = arith.maximumf %6, %7 : vector<2x128xf32>
    %9 = arith.truncf %8 : vector<2x128xf32> to vector<2x128xbf16>
    %c0_6 = arith.constant 0 : index
    %c0_7 = arith.constant 0 : index
    %10 = vector.load %arg4[%c0_6, %c0_7] : memref<128x128xbf16, #tpu.memory_space<vmem>>, vector<128x128xbf16>
    %cst_8 = arith.constant dense<0.000000e+00> : vector<2x128xf32>
    %11 = tpu.matmul %9, %10, %cst_8 {dimension_numbers = #tpu.dot_dimension_numbers<[1], [0], [0], [1], [0, 0, 1, 1], [], []>} : vector<2x128xbf16>, vector<128x128xbf16>, vector<2x128xf32> -> vector<2x128xf32>
    %c0_9 = arith.constant 0 : index
    %c0_10 = arith.constant 0 : index
    %12 = vector.load %arg5[%c0_9, %c0_10] : memref<1x128xf32, #tpu.memory_space<vmem>>, vector<1x128xf32>
    %13 = vector.broadcast %12 : vector<1x128xf32> to vector<2x128xf32>
    %14 = arith.addf %11, %13 : vector<2x128xf32>
    %cst_11 = arith.constant 0.000000e+00 : f32
    %15 = vector.broadcast %cst_11 : f32 to vector<2x128xf32>
    %16 = arith.maximumf %14, %15 : vector<2x128xf32>
    %17 = arith.truncf %16 : vector<2x128xf32> to vector<2x128xbf16>
    %c0_12 = arith.constant 0 : index
    %c0_13 = arith.constant 0 : index
    %18 = vector.load %arg6[%c0_12, %c0_13] : memref<128x128xbf16, #tpu.memory_space<vmem>>, vector<128x128xbf16>
    %cst_14 = arith.constant dense<0.000000e+00> : vector<2x128xf32>
    %19 = tpu.matmul %17, %18, %cst_14 {dimension_numbers = #tpu.dot_dimension_numbers<[1], [0], [0], [1], [0, 0, 1, 1], [], []>} : vector<2x128xbf16>, vector<128x128xbf16>, vector<2x128xf32> -> vector<2x128xf32>
    %20 = arith.truncf %19 : vector<2x128xf32> to vector<2x128xbf16>
    %c0_15 = arith.constant 0 : index
    %c0_16 = arith.constant 0 : index
    %21 = vector.load %arg7[%c0_15, %c0_16] : memref<2x128xbf16, #tpu.memory_space<vmem>>, vector<2x128xbf16>
    tpu.vector_store %arg7[%c0_15, %c0_16], %20 {strides = array<i32>} : memref<2x128xbf16, #tpu.memory_space<vmem>>, vector<2x128xbf16>,
    return
  }
  func.func @transform_0(%arg0: i32) -> (i32, i32) {
    %c0_i32 = arith.constant 0 : i32
    %c0_i32_0 = arith.constant 0 : i32
    return %arg0, %c0_i32 : i32, i32
  }
  func.func @transform_1(%arg0: i32) -> (i32, i32) {
    %c0_i32 = arith.constant 0 : i32
    %c0_i32_0 = arith.constant 0 : i32
    %c0_i32_1 = arith.constant 0 : i32
    return %c0_i32, %c0_i32_0 : i32, i32
  }
  func.func @transform_2(%arg0: i32) -> (i32, i32) {
    %c0_i32 = arith.constant 0 : i32
    %c0_i32_0 = arith.constant 0 : i32
    %c0_i32_1 = arith.constant 0 : i32
    return %c0_i32, %c0_i32_0 : i32, i32
  }
  func.func @transform_3(%arg0: i32) -> (i32, i32) {
    %c0_i32 = arith.constant 0 : i32
    %c0_i32_0 = arith.constant 0 : i32
    %c0_i32_1 = arith.constant 0 : i32
    return %c0_i32, %c0_i32_0 : i32, i32
  }
  func.func @transform_4(%arg0: i32) -> (i32, i32) {
    %c0_i32 = arith.constant 0 : i32
    %c0_i32_0 = arith.constant 0 : i32
    %c0_i32_1 = arith.constant 0 : i32
    return %c0_i32, %c0_i32_0 : i32, i32
  }
  func.func @transform_5(%arg0: i32) -> (i32, i32) {
    %c0_i32 = arith.constant 0 : i32
    %c0_i32_0 = arith.constant 0 : i32
    %c0_i32_1 = arith.constant 0 : i32
    return %c0_i32, %c0_i32_0 : i32, i32
  }
  func.func @transform_6(%arg0: i32) -> (i32, i32) {
    %c0_i32 = arith.constant 0 : i32
    %c0_i32_0 = arith.constant 0 : i32
    return %arg0, %c0_i32 : i32, i32
  }
}

</mosaic_0001>

<llo_original>
// kernel: conmlp_forward.1
$region0: #{conmlp_forward.1}
  #allocation0 [shape = 'u32[]', space=smem, size = 0x4, offset = 0x4, fixed_abs, tag = 'smem constant byte address 0x4 - core index']
  #allocation1 [shape = 'u32[144,128]{1,0:T(1,128)}', space=vmem, size = 0x12000, scoped, tag = 'internal scratch']
  %s0 = inlined_call_operand.vmem [shape: f32[2,1024], index: 0, kind: input, shape index: {}]
  %s1 = inlined_call_operand.vmem [shape: bf16[1024,128], index: 1, kind: input, shape index: {}]
  %s2 = inlined_call_operand.vmem [shape: f32[1,128], index: 2, kind: input, shape index: {}]
  %s3 = inlined_call_operand.vmem [shape: bf16[128,128], index: 3, kind: input, shape index: {}]
  %s4 = inlined_call_operand.vmem [shape: f32[1,128], index: 4, kind: input, shape index: {}]
  %s5 = inlined_call_operand.vmem [shape: bf16[128,128], index: 5, kind: input, shape index: {}]
  %s6 = inlined_call_operand.vmem [shape: bf16[2,128], index: 6, kind: output, shape index: {}]
  %s7 = sld [smem:[#allocation0]]
  $region34: #{conmlp_forward.1} parent=0
    _
  %s9 = ssub.s32 1, %s7
  %s10 = scalar_select 0, %s9, %s7
  // Predicated region
  $region2: #{conmlp_forward.1} parent=0 // pred_check
    _
  $region3: #{conmlp_forward.1} parent=0 // pred_check_branch
    %12 = sbr.rel (0) target = $region5
  $region4: #{conmlp_forward.1} parent=0 // pred_region
    _
  $region5: #{conmlp_forward.1} parent=0 // pred_fallthru
    _
  // Predicated region
  $region6: #{conmlp_forward.1} parent=0 // pred_check
    _
  $region7: #{conmlp_forward.1} parent=0 // pred_check_branch
    %14 = sbr.rel (0) target = $region9
  $region8: #{conmlp_forward.1} parent=0 // pred_region
    _
  $region9: #{conmlp_forward.1} parent=0 // pred_fallthru
    _
  // Predicated region
  $region10: #{conmlp_forward.1} parent=0 // pred_check
    _
  $region11: #{conmlp_forward.1} parent=0 // pred_check_branch
    %16 = sbr.rel (0) target = $region13
  $region12: #{conmlp_forward.1} parent=0 // pred_region
    _
  $region13: #{conmlp_forward.1} parent=0 // pred_fallthru
    _
  // Predicated region
  $region14: #{conmlp_forward.1} parent=0 // pred_check
    _
  $region15: #{conmlp_forward.1} parent=0 // pred_check_branch
    %18 = sbr.rel (0) target = $region17
  $region16: #{conmlp_forward.1} parent=0 // pred_region
    _
  $region17: #{conmlp_forward.1} parent=0 // pred_fallthru
    _
  // Predicated region
  $region18: #{conmlp_forward.1} parent=0 // pred_check
    _
  $region19: #{conmlp_forward.1} parent=0 // pred_check_branch
    %20 = sbr.rel (0) target = $region21
  $region20: #{conmlp_forward.1} parent=0 // pred_region
    _
  $region21: #{conmlp_forward.1} parent=0 // pred_fallthru
    _
  // Predicated region
  $region22: #{conmlp_forward.1} parent=0 // pred_check
    _
  $region23: #{conmlp_forward.1} parent=0 // pred_check_branch
    %22 = sbr.rel (0) target = $region25
  $region24: #{conmlp_forward.1} parent=0 // pred_region
    _
  $region25: #{conmlp_forward.1} parent=0 // pred_fallthru
    _
  %v24 = vld [vmem:[%s0] sm:$0xff]
  %v25 = vld [vmem:[%s0 + $0x8] sm:$0xff]
  %v28 = vcombine.high %v24, %v24
  %v30 = vunpack.c.l.s4 1983009808
  %v31 = vunpack.c.0.s8 %v30
  %v32 = vlaneseq
  %v33 = vshrl.u32 %v32, 7
  %v34 = vsub.s32 %v31, %v33
  %v35 = vrot.slane %v24, %v34
  %v37 = vunpack.c.l.s4 1983009808
  %v38 = vunpack.c.0.s8 %v37
  %v39 = vlaneseq
  %v40 = vshrl.u32 %v39, 7
  %v41 = vsub.s32 %v38, %v40
  %v42 = vrot.slane %v28, %v41
  %v43 = vcombine.high %v35, %v35
  %v44 = vcombine.high %v42, %v42
  %v45 = vcombine.high %v25, %v25
  %v47 = vunpack.c.l.s4 1983009808
  %v48 = vunpack.c.0.s8 %v47
  %v49 = vlaneseq
  %v50 = vshrl.u32 %v49, 7
  %v51 = vsub.s32 %v48, %v50
  %v52 = vrot.slane %v25, %v51
  %v54 = vunpack.c.l.s4 1983009808
  %v55 = vunpack.c.0.s8 %v54
  %v56 = vlaneseq
  %v57 = vshrl.u32 %v56, 7
  %v58 = vsub.s32 %v55, %v57
  %v59 = vrot.slane %v45, %v58
  %v60 = vcombine.high %v52, %v52
  %v61 = vcombine.high %v59, %v59
  %v70 = vpack.c.bf16 %v35, %v35
  %v71 = vpack.c.bf16 %v43, %v43
  %v72 = vpack.c.bf16 %v42, %v42
  %v73 = vpack.c.bf16 %v44, %v44
  %v74 = vpack.c.bf16 %v52, %v52
  %v75 = vpack.c.bf16 %v60, %v60
  %v76 = vpack.c.bf16 %v59, %v59
  %v77 = vpack.c.bf16 %v61, %v61
  %v78 = vld [vmem:[%s1] sm:$0xf]
  %v79 = vld [vmem:[%s1 + $0x4] sm:$0xf]
  %v80 = vld [vmem:[%s1 + $0x8] sm:$0xf]
  %v81 = vld [vmem:[%s1 + $0xc] sm:$0xf]
  %v82 = vld [vmem:[%s1 + $0x10] sm:$0xf]
  %v83 = vld [vmem:[%s1 + $0x14] sm:$0xf]
  %v84 = vld [vmem:[%s1 + $0x18] sm:$0xf]
  %v85 = vld [vmem:[%s1 + $0x1c] sm:$0xf]
  %v86 = vld [vmem:[%s1 + $0x20] sm:$0xf]
  %v87 = vld [vmem:[%s1 + $0x24] sm:$0xf]
  %v88 = vld [vmem:[%s1 + $0x28] sm:$0xf]
  %v89 = vld [vmem:[%s1 + $0x2c] sm:$0xf]
  %v90 = vld [vmem:[%s1 + $0x30] sm:$0xf]
  %v91 = vld [vmem:[%s1 + $0x34] sm:$0xf]
  %v92 = vld [vmem:[%s1 + $0x38] sm:$0xf]
  %v93 = vld [vmem:[%s1 + $0x3c] sm:$0xf]
  %v94 = vld [vmem:[%s1 + $0x40] sm:$0xf]
  %v95 = vld [vmem:[%s1 + $0x44] sm:$0xf]
  %v96 = vld [vmem:[%s1 + $0x48] sm:$0xf]
  %v97 = vld [vmem:[%s1 + $0x4c] sm:$0xf]
  %v98 = vld [vmem:[%s1 + $0x50] sm:$0xf]
  %v99 = vld [vmem:[%s1 + $0x54] sm:$0xf]
  %v100 = vld [vmem:[%s1 + $0x58] sm:$0xf]
  %v101 = vld [vmem:[%s1 + $0x5c] sm:$0xf]
  %v102 = vld [vmem:[%s1 + $0x60] sm:$0xf]
  %v103 = vld [vmem:[%s1 + $0x64] sm:$0xf]
  %v104 = vld [vmem:[%s1 + $0x68] sm:$0xf]
  %v105 = vld [vmem:[%s1 + $0x6c] sm:$0xf]
  %v106 = vld [vmem:[%s1 + $0x70] sm:$0xf]
  %v107 = vld [vmem:[%s1 + $0x74] sm:$0xf]
  %v108 = vld [vmem:[%s1 + $0x78] sm:$0xf]
  %v109 = vld [vmem:[%s1 + $0x7c] sm:$0xf]
  %v110 = vld [vmem:[%s1 + $0x80] sm:$0xf]
  %v111 = vld [vmem:[%s1 + $0x84] sm:$0xf]
  %v112 = vld [vmem:[%s1 + $0x88] sm:$0xf]
  %v113 = vld [vmem:[%s1 + $0x8c] sm:$0xf]
  %v114 = vld [vmem:[%s1 + $0x90] sm:$0xf]
  %v115 = vld [vmem:[%s1 + $0x94] sm:$0xf]
  %v116 = vld [vmem:[%s1 + $0x98] sm:$0xf]
  %v117 = vld [vmem:[%s1 + $0x9c] sm:$0xf]
  %v118 = vld [vmem:[%s1 + $0xa0] sm:$0xf]
  %v119 = vld [vmem:[%s1 + $0xa4] sm:$0xf]
  %v120 = vld [vmem:[%s1 + $0xa8] sm:$0xf]
  %v121 = vld [vmem:[%s1 + $0xac] sm:$0xf]
  %v122 = vld [vmem:[%s1 + $0xb0] sm:$0xf]
  %v123 = vld [vmem:[%s1 + $0xb4] sm:$0xf]
  %v124 = vld [vmem:[%s1 + $0xb8] sm:$0xf]
  %v125 = vld [vmem:[%s1 + $0xbc] sm:$0xf]
  %v126 = vld [vmem:[%s1 + $0xc0] sm:$0xf]
  %v127 = vld [vmem:[%s1 + $0xc4] sm:$0xf]
  %v128 = vld [vmem:[%s1 + $0xc8] sm:$0xf]
  %v129 = vld [vmem:[%s1 + $0xcc] sm:$0xf]
  %v130 = vld [vmem:[%s1 + $0xd0] sm:$0xf]
  %v131 = vld [vmem:[%s1 + $0xd4] sm:$0xf]
  %v132 = vld [vmem:[%s1 + $0xd8] sm:$0xf]
  %v133 = vld [vmem:[%s1 + $0xdc] sm:$0xf]
  %v134 = vld [vmem:[%s1 + $0xe0] sm:$0xf]
  %v135 = vld [vmem:[%s1 + $0xe4] sm:$0xf]
  %v136 = vld [vmem:[%s1 + $0xe8] sm:$0xf]
  %v137 = vld [vmem:[%s1 + $0xec] sm:$0xf]
  %v138 = vld [vmem:[%s1 + $0xf0] sm:$0xf]
  %v139 = vld [vmem:[%s1 + $0xf4] sm:$0xf]
  %v140 = vld [vmem:[%s1 + $0xf8] sm:$0xf]
  %v141 = vld [vmem:[%s1 + $0xfc] sm:$0xf]
  %v142 = vld [vmem:[%s1 + $0x100] sm:$0xf]
  %v143 = vld [vmem:[%s1 + $0x104] sm:$0xf]
  %v144 = vld [vmem:[%s1 + $0x108] sm:$0xf]
  %v145 = vld [vmem:[%s1 + $0x10c] sm:$0xf]
  %v146 = vld [vmem:[%s1 + $0x110] sm:$0xf]
  %v147 = vld [vmem:[%s1 + $0x114] sm:$0xf]
  %v148 = vld [vmem:[%s1 + $0x118] sm:$0xf]
  %v149 = vld [vmem:[%s1 + $0x11c] sm:$0xf]
  %v150 = vld [vmem:[%s1 + $0x120] sm:$0xf]
  %v151 = vld [vmem:[%s1 + $0x124] sm:$0xf]
  %v152 = vld [vmem:[%s1 + $0x128] sm:$0xf]
  %v153 = vld [vmem:[%s1 + $0x12c] sm:$0xf]
  %v154 = vld [vmem:[%s1 + $0x130] sm:$0xf]
  %v155 = vld [vmem:[%s1 + $0x134] sm:$0xf]
  %v156 = vld [vmem:[%s1 + $0x138] sm:$0xf]
  %v157 = vld [vmem:[%s1 + $0x13c] sm:$0xf]
  %v158 = vld [vmem:[%s1 + $0x140] sm:$0xf]
  %v159 = vld [vmem:[%s1 + $0x144] sm:$0xf]
  %v160 = vld [vmem:[%s1 + $0x148] sm:$0xf]
  %v161 = vld [vmem:[%s1 + $0x14c] sm:$0xf]
  %v162 = vld [vmem:[%s1 + $0x150] sm:$0xf]
  %v163 = vld [vmem:[%s1 + $0x154] sm:$0xf]
  %v164 = vld [vmem:[%s1 + $0x158] sm:$0xf]
  %v165 = vld [vmem:[%s1 + $0x15c] sm:$0xf]
  %v166 = vld [vmem:[%s1 + $0x160] sm:$0xf]
  %v167 = vld [vmem:[%s1 + $0x164] sm:$0xf]
  %v168 = vld [vmem:[%s1 + $0x168] sm:$0xf]
  %v169 = vld [vmem:[%s1 + $0x16c] sm:$0xf]
  %v170 = vld [vmem:[%s1 + $0x170] sm:$0xf]
  %v171 = vld [vmem:[%s1 + $0x174] sm:$0xf]
  %v172 = vld [vmem:[%s1 + $0x178] sm:$0xf]
  %v173 = vld [vmem:[%s1 + $0x17c] sm:$0xf]
  %v174 = vld [vmem:[%s1 + $0x180] sm:$0xf]
  %v175 = vld [vmem:[%s1 + $0x184] sm:$0xf]
  %v176 = vld [vmem:[%s1 + $0x188] sm:$0xf]
  %v177 = vld [vmem:[%s1 + $0x18c] sm:$0xf]
  %v178 = vld [vmem:[%s1 + $0x190] sm:$0xf]
  %v179 = vld [vmem:[%s1 + $0x194] sm:$0xf]
  %v180 = vld [vmem:[%s1 + $0x198] sm:$0xf]
  %v181 = vld [vmem:[%s1 + $0x19c] sm:$0xf]
  %v182 = vld [vmem:[%s1 + $0x1a0] sm:$0xf]
  %v183 = vld [vmem:[%s1 + $0x1a4] sm:$0xf]
  %v184 = vld [vmem:[%s1 + $0x1a8] sm:$0xf]
  %v185 = vld [vmem:[%s1 + $0x1ac] sm:$0xf]
  %v186 = vld [vmem:[%s1 + $0x1b0] sm:$0xf]
  %v187 = vld [vmem:[%s1 + $0x1b4] sm:$0xf]
  %v188 = vld [vmem:[%s1 + $0x1b8] sm:$0xf]
  %v189 = vld [vmem:[%s1 + $0x1bc] sm:$0xf]
  %v190 = vld [vmem:[%s1 + $0x1c0] sm:$0xf]
  %v191 = vld [vmem:[%s1 + $0x1c4] sm:$0xf]
  %v192 = vld [vmem:[%s1 + $0x1c8] sm:$0xf]
  %v193 = vld [vmem:[%s1 + $0x1cc] sm:$0xf]
  %v194 = vld [vmem:[%s1 + $0x1d0] sm:$0xf]
  %v195 = vld [vmem:[%s1 + $0x1d4] sm:$0xf]
  %v196 = vld [vmem:[%s1 + $0x1d8] sm:$0xf]
  %v197 = vld [vmem:[%s1 + $0x1dc] sm:$0xf]
  %v198 = vld [vmem:[%s1 + $0x1e0] sm:$0xf]
  %v199 = vld [vmem:[%s1 + $0x1e4] sm:$0xf]
  %v200 = vld [vmem:[%s1 + $0x1e8] sm:$0xf]
  %v201 = vld [vmem:[%s1 + $0x1ec] sm:$0xf]
  %v202 = vld [vmem:[%s1 + $0x1f0] sm:$0xf]
  %v203 = vld [vmem:[%s1 + $0x1f4] sm:$0xf]
  %v204 = vld [vmem:[%s1 + $0x1f8] sm:$0xf]
  %v205 = vld [vmem:[%s1 + $0x1fc] sm:$0xf]
  %v206 = vld [vmem:[%s2] sm:$0x1]
  %v208 = vlaneseq
  %v209 = vshrl.u32 %v208, 7
  %v210 = vsub.s32 0, %v209
  %v211 = vrot.slane %v206, %v210
  %v341 = vunpack.c.l.b16 %v78
  %v342 = vunpack.c.l.b16 %v79
  %v343 = vunpack.c.l.b16 %v80
  %v344 = vunpack.c.l.b16 %v81
  %v345 = vunpack.c.l.b16 %v82
  %v346 = vunpack.c.l.b16 %v83
  %v347 = vunpack.c.l.b16 %v84
  %v348 = vunpack.c.l.b16 %v85
  %v349 = vunpack.c.l.b16 %v86
  %v350 = vunpack.c.l.b16 %v87
  %v351 = vunpack.c.l.b16 %v88
  %v352 = vunpack.c.l.b16 %v89
  %v353 = vunpack.c.l.b16 %v90
  %v354 = vunpack.c.l.b16 %v91
  %v355 = vunpack.c.l.b16 %v92
  %v356 = vunpack.c.l.b16 %v93
  %v357 = vunpack.c.l.b16 %v94
  %v358 = vunpack.c.l.b16 %v95
  %v359 = vunpack.c.l.b16 %v96
  %v360 = vunpack.c.l.b16 %v97
  %v361 = vunpack.c.l.b16 %v98
  %v362 = vunpack.c.l.b16 %v99
  %v363 = vunpack.c.l.b16 %v100
  %v364 = vunpack.c.l.b16 %v101
  %v365 = vunpack.c.l.b16 %v102
  %v366 = vunpack.c.l.b16 %v103
  %v367 = vunpack.c.l.b16 %v104
  %v368 = vunpack.c.l.b16 %v105
  %v369 = vunpack.c.l.b16 %v106
  %v370 = vunpack.c.l.b16 %v107
  %v371 = vunpack.c.l.b16 %v108
  %v372 = vunpack.c.l.b16 %v109
  %v373 = vunpack.c.l.b16 %v110
  %v374 = vunpack.c.l.b16 %v111
  %v375 = vunpack.c.l.b16 %v112
  %v376 = vunpack.c.l.b16 %v113
  %v377 = vunpack.c.l.b16 %v114
  %v378 = vunpack.c.l.b16 %v115
  %v379 = vunpack.c.l.b16 %v116
  %v380 = vunpack.c.l.b16 %v117
  %v381 = vunpack.c.l.b16 %v118
  %v382 = vunpack.c.l.b16 %v119
  %v383 = vunpack.c.l.b16 %v120
  %v384 = vunpack.c.l.b16 %v121
  %v385 = vunpack.c.l.b16 %v122
  %v386 = vunpack.c.l.b16 %v123
  %v387 = vunpack.c.l.b16 %v124
  %v388 = vunpack.c.l.b16 %v125
  %v389 = vunpack.c.l.b16 %v126
  %v390 = vunpack.c.l.b16 %v127
  %v391 = vunpack.c.l.b16 %v128
  %v392 = vunpack.c.l.b16 %v129
  %v393 = vunpack.c.l.b16 %v130
  %v394 = vunpack.c.l.b16 %v131
  %v395 = vunpack.c.l.b16 %v132
  %v396 = vunpack.c.l.b16 %v133
  %v397 = vunpack.c.l.b16 %v134
  %v398 = vunpack.c.l.b16 %v135
  %v399 = vunpack.c.l.b16 %v136
  %v400 = vunpack.c.l.b16 %v137
  %v401 = vunpack.c.l.b16 %v138
  %v402 = vunpack.c.l.b16 %v139
  %v403 = vunpack.c.l.b16 %v140
  %v404 = vunpack.c.l.b16 %v141
  %v405 = vunpack.c.l.b16 %v142
  %v406 = vunpack.c.l.b16 %v143
  %v407 = vunpack.c.l.b16 %v144
  %v408 = vunpack.c.l.b16 %v145
  %v409 = vunpack.c.l.b16 %v146
  %v410 = vunpack.c.l.b16 %v147
  %v411 = vunpack.c.l.b16 %v148
  %v412 = vunpack.c.l.b16 %v149
  %v413 = vunpack.c.l.b16 %v150
  %v414 = vunpack.c.l.b16 %v151
  %v415 = vunpack.c.l.b16 %v152
  %v416 = vunpack.c.l.b16 %v153
  %v417 = vunpack.c.l.b16 %v154
  %v418 = vunpack.c.l.b16 %v155
  %v419 = vunpack.c.l.b16 %v156
  %v420 = vunpack.c.l.b16 %v157
  %v421 = vunpack.c.l.b16 %v158
  %v422 = vunpack.c.l.b16 %v159
  %v423 = vunpack.c.l.b16 %v160
  %v424 = vunpack.c.l.b16 %v161
  %v425 = vunpack.c.l.b16 %v162
  %v426 = vunpack.c.l.b16 %v163
  %v427 = vunpack.c.l.b16 %v164
  %v428 = vunpack.c.l.b16 %v165
  %v429 = vunpack.c.l.b16 %v166
  %v430 = vunpack.c.l.b16 %v167
  %v431 = vunpack.c.l.b16 %v168
  %v432 = vunpack.c.l.b16 %v169
  %v433 = vunpack.c.l.b16 %v170
  %v434 = vunpack.c.l.b16 %v171
  %v435 = vunpack.c.l.b16 %v172
  %v436 = vunpack.c.l.b16 %v173
  %v437 = vunpack.c.l.b16 %v174
  %v438 = vunpack.c.l.b16 %v175
  %v439 = vunpack.c.l.b16 %v176
  %v440 = vunpack.c.l.b16 %v177
  %v441 = vunpack.c.l.b16 %v178
  %v442 = vunpack.c.l.b16 %v179
  %v443 = vunpack.c.l.b16 %v180
  %v444 = vunpack.c.l.b16 %v181
  %v445 = vunpack.c.l.b16 %v182
  %v446 = vunpack.c.l.b16 %v183
  %v447 = vunpack.c.l.b16 %v184
  %v448 = vunpack.c.l.b16 %v185
  %v449 = vunpack.c.l.b16 %v186
  %v450 = vunpack.c.l.b16 %v187
  %v451 = vunpack.c.l.b16 %v188
  %v452 = vunpack.c.l.b16 %v189
  %v453 = vunpack.c.l.b16 %v190
  %v454 = vunpack.c.l.b16 %v191
  %v455 = vunpack.c.l.b16 %v192
  %v456 = vunpack.c.l.b16 %v193
  %v457 = vunpack.c.l.b16 %v194
  %v458 = vunpack.c.l.b16 %v195
  %v459 = vunpack.c.l.b16 %v196
  %v460 = vunpack.c.l.b16 %v197
  %v461 = vunpack.c.l.b16 %v198
  %v462 = vunpack.c.l.b16 %v199
  %v463 = vunpack.c.l.b16 %v200
  %v464 = vunpack.c.l.b16 %v201
  %v465 = vunpack.c.l.b16 %v202
  %v466 = vunpack.c.l.b16 %v203
  %v467 = vunpack.c.l.b16 %v204
  %v468 = vunpack.c.l.b16 %v205
  %v469 = vpack.c.b16 %v342, %v341
  %v470 = vpack.c.b16 %v344, %v343
  %v471 = vpack.c.b16 %v346, %v345
  %v472 = vpack.c.b16 %v348, %v347
  %v473 = vpack.c.b16 %v350, %v349
  %v474 = vpack.c.b16 %v352, %v351
  %v475 = vpack.c.b16 %v354, %v353
  %v476 = vpack.c.b16 %v356, %v355
  %v477 = vpack.c.b16 %v358, %v357
  %v478 = vpack.c.b16 %v360, %v359
  %v479 = vpack.c.b16 %v362, %v361
  %v480 = vpack.c.b16 %v364, %v363
  %v481 = vpack.c.b16 %v366, %v365
  %v482 = vpack.c.b16 %v368, %v367
  %v483 = vpack.c.b16 %v370, %v369
  %v484 = vpack.c.b16 %v372, %v371
  %v485 = vpack.c.b16 %v374, %v373
  %v486 = vpack.c.b16 %v376, %v375
  %v487 = vpack.c.b16 %v378, %v377
  %v488 = vpack.c.b16 %v380, %v379
  %v489 = vpack.c.b16 %v382, %v381
  %v490 = vpack.c.b16 %v384, %v383
  %v491 = vpack.c.b16 %v386, %v385
  %v492 = vpack.c.b16 %v388, %v387
  %v493 = vpack.c.b16 %v390, %v389
  %v494 = vpack.c.b16 %v392, %v391
  %v495 = vpack.c.b16 %v394, %v393
  %v496 = vpack.c.b16 %v396, %v395
  %v497 = vpack.c.b16 %v398, %v397
  %v498 = vpack.c.b16 %v400, %v399
  %v499 = vpack.c.b16 %v402, %v401
  %v500 = vpack.c.b16 %v404, %v403
  %v501 = vpack.c.b16 %v406, %v405
  %v502 = vpack.c.b16 %v408, %v407
  %v503 = vpack.c.b16 %v410, %v409
  %v504 = vpack.c.b16 %v412, %v411
  %v505 = vpack.c.b16 %v414, %v413
  %v506 = vpack.c.b16 %v416, %v415
  %v507 = vpack.c.b16 %v418, %v417
  %v508 = vpack.c.b16 %v420, %v419
  %v509 = vpack.c.b16 %v422, %v421
  %v510 = vpack.c.b16 %v424, %v423
  %v511 = vpack.c.b16 %v426, %v425
  %v512 = vpack.c.b16 %v428, %v427
  %v513 = vpack.c.b16 %v430, %v429
  %v514 = vpack.c.b16 %v432, %v431
  %v515 = vpack.c.b16 %v434, %v433
  %v516 = vpack.c.b16 %v436, %v435
  %v517 = vpack.c.b16 %v438, %v437
  %v518 = vpack.c.b16 %v440, %v439
  %v519 = vpack.c.b16 %v442, %v441
  %v520 = vpack.c.b16 %v444, %v443
  %v521 = vpack.c.b16 %v446, %v445
  %v522 = vpack.c.b16 %v448, %v447
  %v523 = vpack.c.b16 %v450, %v449
  %v524 = vpack.c.b16 %v452, %v451
  %v525 = vpack.c.b16 %v454, %v453
  %v526 = vpack.c.b16 %v456, %v455
  %v527 = vpack.c.b16 %v458, %v457
  %v528 = vpack.c.b16 %v460, %v459
  %v529 = vpack.c.b16 %v462, %v461
  %v530 = vpack.c.b16 %v464, %v463
  %v531 = vpack.c.b16 %v466, %v465
  %v532 = vpack.c.b16 %v468, %v467
  %597 = vmatprep.subr.bf16.mxu0 0
  %598 = vmatpush1.bf16.msra.mxu0 %v469
  %599 = vmatprep.subr.bf16.mxu0 0
  %600 = vmatpush1.bf16.msra.mxu0 %v470
  %601 = vmatprep.subr.bf16.mxu0 0
  %602 = vmatpush1.bf16.msra.mxu0 %v471
  %603 = vmatprep.subr.bf16.mxu0 0
  %604 = vmatpush1.bf16.msra.mxu0 %v472
  %605 = vmatprep.subr.bf16.mxu0 0
  %606 = vmatpush1.bf16.msra.mxu0 %v473
  %607 = vmatprep.subr.bf16.mxu0 0
  %608 = vmatpush1.bf16.msra.mxu0 %v474
  %609 = vmatprep.subr.bf16.mxu0 0
  %610 = vmatpush1.bf16.msra.mxu0 %v475
  %611 = vmatprep.subr.bf16.mxu0 0
  %612 = vmatpush1.bf16.msra.mxu0 %v476
  %613 = vmatprep.subr.bf16.mxu0 0
  %614 = vmatpush1.bf16.msra.mxu0 %v477
  %615 = vmatprep.subr.bf16.mxu0 0
  %616 = vmatpush1.bf16.msra.mxu0 %v478
  %617 = vmatprep.subr.bf16.mxu0 0
  %618 = vmatpush1.bf16.msra.mxu0 %v479
  %619 = vmatprep.subr.bf16.mxu0 0
  %620 = vmatpush1.bf16.msra.mxu0 %v480
  %621 = vmatprep.subr.bf16.mxu0 0
  %622 = vmatpush1.bf16.msra.mxu0 %v481
  %623 = vmatprep.subr.bf16.mxu0 0
  %624 = vmatpush1.bf16.msra.mxu0 %v482
  %625 = vmatprep.subr.bf16.mxu0 0
  %626 = vmatpush1.bf16.msra.mxu0 %v483
  %627 = vmatprep.subr.bf16.mxu0 0
  %628 = vmatpush1.bf16.msra.mxu0 %v484
  %629 = vmatprep.mubr.bf16.mxu0 %v71
  %630 = vmatmul.mubr.bf16.gmra.mrb[0].mxu0 %v70
  %v631 = vpop.f32.mrb[0].mxu0
  %v632 = vadd.f32 %v211, %v631
  %v633 = vpop.f32.mrb[0].mxu0
  %v634 = vpop.f32.mrb[0].mxu0
  %v635 = vpop.f32.mrb[0].mxu0
  %636 = vdwg.mxu0
  %637 = vmatprep.subr.bf16.mxu0 0
  %638 = vmatpush1.bf16.msra.mxu0 %v485
  %639 = vmatprep.subr.bf16.mxu0 0
  %640 = vmatpush1.bf16.msra.mxu0 %v486
  %641 = vmatprep.subr.bf16.mxu0 0
  %642 = vmatpush1.bf16.msra.mxu0 %v487
  %643 = vmatprep.subr.bf16.mxu0 0
  %644 = vmatpush1.bf16.msra.mxu0 %v488
  %645 = vmatprep.subr.bf16.mxu0 0
  %646 = vmatpush1.bf16.msra.mxu0 %v489
  %647 = vmatprep.subr.bf16.mxu0 0
  %648 = vmatpush1.bf16.msra.mxu0 %v490
  %649 = vmatprep.subr.bf16.mxu0 0
  %650 = vmatpush1.bf16.msra.mxu0 %v491
  %651 = vmatprep.subr.bf16.mxu0 0
  %652 = vmatpush1.bf16.msra.mxu0 %v492
  %653 = vmatprep.subr.bf16.mxu0 0
  %654 = vmatpush1.bf16.msra.mxu0 %v493
  %655 = vmatprep.subr.bf16.mxu0 0
  %656 = vmatpush1.bf16.msra.mxu0 %v494
  %657 = vmatprep.subr.bf16.mxu0 0
  %658 = vmatpush1.bf16.msra.mxu0 %v495
  %659 = vmatprep.subr.bf16.mxu0 0
  %660 = vmatpush1.bf16.msra.mxu0 %v496
  %661 = vmatprep.subr.bf16.mxu0 0
  %662 = vmatpush1.bf16.msra.mxu0 %v497
  %663 = vmatprep.subr.bf16.mxu0 0
  %664 = vmatpush1.bf16.msra.mxu0 %v498
  %665 = vmatprep.subr.bf16.mxu0 0
  %666 = vmatpush1.bf16.msra.mxu0 %v499
  %667 = vmatprep.subr.bf16.mxu0 0
  %668 = vmatpush1.bf16.msra.mxu0 %v500
  %669 = vmatprep.mubr.bf16.mxu0 %v73
  %670 = vmatmul.mubr.bf16.gmra.mrb[0].mxu0 %v72
  %v671 = vpop.f32.mrb[0].mxu0
  %v672 = vadd.f32 %v632, %v671
  %v673 = vpop.f32.mrb[0].mxu0
  %v674 = vpop.f32.mrb[0].mxu0
  %v675 = vpop.f32.mrb[0].mxu0
  %676 = vdwg.mxu0
  %677 = vmatprep.subr.bf16.mxu0 0
  %678 = vmatpush1.bf16.msra.mxu0 %v501
  %679 = vmatprep.subr.bf16.mxu0 0
  %680 = vmatpush1.bf16.msra.mxu0 %v502
  %681 = vmatprep.subr.bf16.mxu0 0
  %682 = vmatpush1.bf16.msra.mxu0 %v503
  %683 = vmatprep.subr.bf16.mxu0 0
  %684 = vmatpush1.bf16.msra.mxu0 %v504
  %685 = vmatprep.subr.bf16.mxu0 0
  %686 = vmatpush1.bf16.msra.mxu0 %v505
  %687 = vmatprep.subr.bf16.mxu0 0
  %688 = vmatpush1.bf16.msra.mxu0 %v506
  %689 = vmatprep.subr.bf16.mxu0 0
  %690 = vmatpush1.bf16.msra.mxu0 %v507
  %691 = vmatprep.subr.bf16.mxu0 0
  %692 = vmatpush1.bf16.msra.mxu0 %v508
  %693 = vmatprep.subr.bf16.mxu0 0
  %694 = vmatpush1.bf16.msra.mxu0 %v509
  %695 = vmatprep.subr.bf16.mxu0 0
  %696 = vmatpush1.bf16.msra.mxu0 %v510
  %697 = vmatprep.subr.bf16.mxu0 0
  %698 = vmatpush1.bf16.msra.mxu0 %v511
  %699 = vmatprep.subr.bf16.mxu0 0
  %700 = vmatpush1.bf16.msra.mxu0 %v512
  %701 = vmatprep.subr.bf16.mxu0 0
  %702 = vmatpush1.bf16.msra.mxu0 %v513
  %703 = vmatprep.subr.bf16.mxu0 0
  %704 = vmatpush1.bf16.msra.mxu0 %v514
  %705 = vmatprep.subr.bf16.mxu0 0
  %706 = vmatpush1.bf16.msra.mxu0 %v515
  %707 = vmatprep.subr.bf16.mxu0 0
  %708 = vmatpush1.bf16.msra.mxu0 %v516
  %709 = vmatprep.mubr.bf16.mxu0 %v75
  %710 = vmatmul.mubr.bf16.gmra.mrb[0].mxu0 %v74
  %v711 = vpop.f32.mrb[0].mxu0
  %v712 = vadd.f32 %v672, %v711
  %v713 = vpop.f32.mrb[0].mxu0
  %v714 = vpop.f32.mrb[0].mxu0
  %v715 = vpop.f32.mrb[0].mxu0
  %716 = vdwg.mxu0
  %717 = vmatprep.subr.bf16.mxu0 0
  %718 = vmatpush1.bf16.msra.mxu0 %v517
  %719 = vmatprep.subr.bf16.mxu0 0
  %720 = vmatpush1.bf16.msra.mxu0 %v518
  %721 = vmatprep.subr.bf16.mxu0 0
  %722 = vmatpush1.bf16.msra.mxu0 %v519
  %723 = vmatprep.subr.bf16.mxu0 0
  %724 = vmatpush1.bf16.msra.mxu0 %v520
  %725 = vmatprep.subr.bf16.mxu0 0
  %726 = vmatpush1.bf16.msra.mxu0 %v521
  %727 = vmatprep.subr.bf16.mxu0 0
  %728 = vmatpush1.bf16.msra.mxu0 %v522
  %729 = vmatprep.subr.bf16.mxu0 0
  %730 = vmatpush1.bf16.msra.mxu0 %v523
  %731 = vmatprep.subr.bf16.mxu0 0
  %732 = vmatpush1.bf16.msra.mxu0 %v524
  %733 = vmatprep.subr.bf16.mxu0 0
  %734 = vmatpush1.bf16.msra.mxu0 %v525
  %735 = vmatprep.subr.bf16.mxu0 0
  %736 = vmatpush1.bf16.msra.mxu0 %v526
  %737 = vmatprep.subr.bf16.mxu0 0
  %738 = vmatpush1.bf16.msra.mxu0 %v527
  %739 = vmatprep.subr.bf16.mxu0 0
  %740 = vmatpush1.bf16.msra.mxu0 %v528
  %741 = vmatprep.subr.bf16.mxu0 0
  %742 = vmatpush1.bf16.msra.mxu0 %v529
  %743 = vmatprep.subr.bf16.mxu0 0
  %744 = vmatpush1.bf16.msra.mxu0 %v530
  %745 = vmatprep.subr.bf16.mxu0 0
  %746 = vmatpush1.bf16.msra.mxu0 %v531
  %747 = vmatprep.subr.bf16.mxu0 0
  %748 = vmatpush1.bf16.msra.mxu0 %v532
  %749 = vmatprep.mubr.bf16.mxu0 %v77
  %750 = vmatmul.mubr.bf16.gmra.mrb[0].mxu0 %v76
  %v751 = vpop.f32.mrb[0].mxu0
  %v752 = vadd.f32 %v712, %v751
  %v753 = vpop.f32.mrb[0].mxu0
  %v754 = vpop.f32.mrb[0].mxu0
  %v755 = vpop.f32.mrb[0].mxu0
  %756 = vdwg.mxu0
  %v757 = vmax.f32 %v752, 0.0
  %v758 = vpack.c.bf16 %v757, %v757
  %v759 = vld [vmem:[%s3] sm:$0xf]
  %v760 = vld [vmem:[%s3 + $0x4] sm:$0xf]
  %v761 = vld [vmem:[%s3 + $0x8] sm:$0xf]
  %v762 = vld [vmem:[%s3 + $0xc] sm:$0xf]
  %v763 = vld [vmem:[%s3 + $0x10] sm:$0xf]
  %v764 = vld [vmem:[%s3 + $0x14] sm:$0xf]
  %v765 = vld [vmem:[%s3 + $0x18] sm:$0xf]
  %v766 = vld [vmem:[%s3 + $0x1c] sm:$0xf]
  %v767 = vld [vmem:[%s3 + $0x20] sm:$0xf]
  %v768 = vld [vmem:[%s3 + $0x24] sm:$0xf]
  %v769 = vld [vmem:[%s3 + $0x28] sm:$0xf]
  %v770 = vld [vmem:[%s3 + $0x2c] sm:$0xf]
  %v771 = vld [vmem:[%s3 + $0x30] sm:$0xf]
  %v772 = vld [vmem:[%s3 + $0x34] sm:$0xf]
  %v773 = vld [vmem:[%s3 + $0x38] sm:$0xf]
  %v774 = vld [vmem:[%s3 + $0x3c] sm:$0xf]
  %v775 = vld [vmem:[%s4] sm:$0x1]
  %v777 = vlaneseq
  %v778 = vshrl.u32 %v777, 7
  %v779 = vsub.s32 0, %v778
  %v780 = vrot.slane %v775, %v779
  %v798 = vunpack.c.l.b16 %v759
  %v799 = vunpack.c.l.b16 %v760
  %v800 = vunpack.c.l.b16 %v761
  %v801 = vunpack.c.l.b16 %v762
  %v802 = vunpack.c.l.b16 %v763
  %v803 = vunpack.c.l.b16 %v764
  %v804 = vunpack.c.l.b16 %v765
  %v805 = vunpack.c.l.b16 %v766
  %v806 = vunpack.c.l.b16 %v767
  %v807 = vunpack.c.l.b16 %v768
  %v808 = vunpack.c.l.b16 %v769
  %v809 = vunpack.c.l.b16 %v770
  %v810 = vunpack.c.l.b16 %v771
  %v811 = vunpack.c.l.b16 %v772
  %v812 = vunpack.c.l.b16 %v773
  %v813 = vunpack.c.l.b16 %v774
  %v814 = vpack.c.b16 %v799, %v798
  %v815 = vpack.c.b16 %v801, %v800
  %v816 = vpack.c.b16 %v803, %v802
  %v817 = vpack.c.b16 %v805, %v804
  %v818 = vpack.c.b16 %v807, %v806
  %v819 = vpack.c.b16 %v809, %v808
  %v820 = vpack.c.b16 %v811, %v810
  %v821 = vpack.c.b16 %v813, %v812
  %830 = vmatprep.subr.bf16.mxu0 0
  %831 = vmatpush1.bf16.msra.mxu0 %v814
  %832 = vmatprep.subr.bf16.mxu0 0
  %833 = vmatpush1.bf16.msra.mxu0 %v815
  %834 = vmatprep.subr.bf16.mxu0 0
  %835 = vmatpush1.bf16.msra.mxu0 %v816
  %836 = vmatprep.subr.bf16.mxu0 0
  %837 = vmatpush1.bf16.msra.mxu0 %v817
  %838 = vmatprep.subr.bf16.mxu0 0
  %839 = vmatpush1.bf16.msra.mxu0 %v818
  %840 = vmatprep.subr.bf16.mxu0 0
  %841 = vmatpush1.bf16.msra.mxu0 %v819
  %842 = vmatprep.subr.bf16.mxu0 0
  %843 = vmatpush1.bf16.msra.mxu0 %v820
  %844 = vmatprep.subr.bf16.mxu0 0
  %845 = vmatpush1.bf16.msra.mxu0 %v821
  %846 = vmatprep.subr.bf16.mxu0 0
  %847 = vmatpush1.bf16.msra.mxu0 0
  %848 = vmatprep.subr.bf16.mxu0 0
  %849 = vmatpush1.bf16.msra.mxu0 0
  %850 = vmatprep.subr.bf16.mxu0 0
  %851 = vmatpush1.bf16.msra.mxu0 0
  %852 = vmatprep.subr.bf16.mxu0 0
  %853 = vmatpush1.bf16.msra.mxu0 0
  %854 = vmatprep.subr.bf16.mxu0 0
  %855 = vmatpush1.bf16.msra.mxu0 0
  %856 = vmatprep.subr.bf16.mxu0 0
  %857 = vmatpush1.bf16.msra.mxu0 0
  %858 = vmatprep.subr.bf16.mxu0 0
  %859 = vmatpush1.bf16.msra.mxu0 0
  %860 = vmatprep.subr.bf16.mxu0 0
  %861 = vmatpush1.bf16.msra.mxu0 0
  %862 = vmatprep.mubr.bf16.mxu0 0
  %863 = vmatmul.mubr.bf16.gmra.mrb[0].mxu0 %v758
  %v864 = vpop.f32.mrb[0].mxu0
  %v865 = vadd.f32 %v780, %v864
  %v866 = vpop.f32.mrb[0].mxu0
  %v867 = vpop.f32.mrb[0].mxu0
  %v868 = vpop.f32.mrb[0].mxu0
  %869 = vdwg.mxu0
  %v870 = vmax.f32 %v865, 0.0
  %v871 = vpack.c.bf16 %v870, %v870
  %v872 = vld [vmem:[%s5] sm:$0xf]
  %v873 = vld [vmem:[%s5 + $0x4] sm:$0xf]
  %v874 = vld [vmem:[%s5 + $0x8] sm:$0xf]
  %v875 = vld [vmem:[%s5 + $0xc] sm:$0xf]
  %v876 = vld [vmem:[%s5 + $0x10] sm:$0xf]
  %v877 = vld [vmem:[%s5 + $0x14] sm:$0xf]
  %v878 = vld [vmem:[%s5 + $0x18] sm:$0xf]
  %v879 = vld [vmem:[%s5 + $0x1c] sm:$0xf]
  %v880 = vld [vmem:[%s5 + $0x20] sm:$0xf]
  %v881 = vld [vmem:[%s5 + $0x24] sm:$0xf]
  %v882 = vld [vmem:[%s5 + $0x28] sm:$0xf]
  %v883 = vld [vmem:[%s5 + $0x2c] sm:$0xf]
  %v884 = vld [vmem:[%s5 + $0x30] sm:$0xf]
  %v885 = vld [vmem:[%s5 + $0x34] sm:$0xf]
  %v886 = vld [vmem:[%s5 + $0x38] sm:$0xf]
  %v887 = vld [vmem:[%s5 + $0x3c] sm:$0xf]
  %v904 = vunpack.c.l.b16 %v872
  %v905 = vunpack.c.l.b16 %v873
  %v906 = vunpack.c.l.b16 %v874
  %v907 = vunpack.c.l.b16 %v875
  %v908 = vunpack.c.l.b16 %v876
  %v909 = vunpack.c.l.b16 %v877
  %v910 = vunpack.c.l.b16 %v878
  %v911 = vunpack.c.l.b16 %v879
  %v912 = vunpack.c.l.b16 %v880
  %v913 = vunpack.c.l.b16 %v881
  %v914 = vunpack.c.l.b16 %v882
  %v915 = vunpack.c.l.b16 %v883
  %v916 = vunpack.c.l.b16 %v884
  %v917 = vunpack.c.l.b16 %v885
  %v918 = vunpack.c.l.b16 %v886
  %v919 = vunpack.c.l.b16 %v887
  %v920 = vpack.c.b16 %v905, %v904
  %v921 = vpack.c.b16 %v907, %v906
  %v922 = vpack.c.b16 %v909, %v908
  %v923 = vpack.c.b16 %v911, %v910
  %v924 = vpack.c.b16 %v913, %v912
  %v925 = vpack.c.b16 %v915, %v914
  %v926 = vpack.c.b16 %v917, %v916
  %v927 = vpack.c.b16 %v919, %v918
  %936 = vmatprep.subr.bf16.mxu0 0
  %937 = vmatpush1.bf16.msra.mxu0 %v920
  %938 = vmatprep.subr.bf16.mxu0 0
  %939 = vmatpush1.bf16.msra.mxu0 %v921
  %940 = vmatprep.subr.bf16.mxu0 0
  %941 = vmatpush1.bf16.msra.mxu0 %v922
  %942 = vmatprep.subr.bf16.mxu0 0
  %943 = vmatpush1.bf16.msra.mxu0 %v923
  %944 = vmatprep.subr.bf16.mxu0 0
  %945 = vmatpush1.bf16.msra.mxu0 %v924
  %946 = vmatprep.subr.bf16.mxu0 0
  %947 = vmatpush1.bf16.msra.mxu0 %v925
  %948 = vmatprep.subr.bf16.mxu0 0
  %949 = vmatpush1.bf16.msra.mxu0 %v926
  %950 = vmatprep.subr.bf16.mxu0 0
  %951 = vmatpush1.bf16.msra.mxu0 %v927
  %952 = vmatprep.subr.bf16.mxu0 0
  %953 = vmatpush1.bf16.msra.mxu0 0
  %954 = vmatprep.subr.bf16.mxu0 0
  %955 = vmatpush1.bf16.msra.mxu0 0
  %956 = vmatprep.subr.bf16.mxu0 0
  %957 = vmatpush1.bf16.msra.mxu0 0
  %958 = vmatprep.subr.bf16.mxu0 0
  %959 = vmatpush1.bf16.msra.mxu0 0
  %960 = vmatprep.subr.bf16.mxu0 0
  %961 = vmatpush1.bf16.msra.mxu0 0
  %962 = vmatprep.subr.bf16.mxu0 0
  %963 = vmatpush1.bf16.msra.mxu0 0
  %964 = vmatprep.subr.bf16.mxu0 0
  %965 = vmatpush1.bf16.msra.mxu0 0
  %966 = vmatprep.subr.bf16.mxu0 0
  %967 = vmatpush1.bf16.msra.mxu0 0
  %968 = vmatprep.mubr.bf16.mxu0 0
  %969 = vmatmul.mubr.bf16.gmra.mrb[0].mxu0 %v871
  %v970 = vpop.f32.mrb[0].mxu0
  %v971 = vadd.f32 0.0, %v970
  %v972 = vpop.f32.mrb[0].mxu0
  %v973 = vpop.f32.mrb[0].mxu0
  %v974 = vpop.f32.mrb[0].mxu0
  %975 = vdwg.mxu0
  %v976 = vpack.c.bf16 %v971, %v971
  %977 = vst [vmem:[%s6] sm:$0x1] %v976
  // Predicated region
  $region26: #{conmlp_forward.1} parent=0 // pred_check
    _
  $region27: #{conmlp_forward.1} parent=0 // pred_check_branch
    %979 = sbr.rel (0) target = $region29
  $region28: #{conmlp_forward.1} parent=0 // pred_region
    _
  $region29: #{conmlp_forward.1} parent=0 // pred_fallthru
    _
  // Predicated region
  $region30: #{conmlp_forward.1} parent=0 // pred_check
    _
  $region31: #{conmlp_forward.1} parent=0 // pred_check_branch
    %981 = sbr.rel (0) target = $region33
  $region32: #{conmlp_forward.1} parent=0 // pred_region
    _
  $region33: #{conmlp_forward.1} parent=0 // pred_fallthru
    _

</llo_original>
